<compile_context>
chip_gen: v5e
topology: v5e:2x2
jax: 0.10.0
libtpu: 0.0.40
codegen_flags: <defaults>
</compile_context>

<pallas_src>
import jax
import jax.numpy as jnp
from jax.experimental import pallas as pl
from jax.experimental.pallas import tpu as pltpu


_LANE = 128
_MM_DTYPE = jnp.bfloat16      # MXU-native matmul dtype (f32 accumulation is kept)
_ACT_DTYPE = jnp.bfloat16     # inter-kernel activation storage in HBM
_CPARAMS = pltpu.CompilerParams(
    dimension_semantics=("parallel",),
    vmem_limit_bytes=48 * 1024 * 1024,
)


# ----------------------------------------------------------------------------
# In-kernel math
# ----------------------------------------------------------------------------
def _mish(y):
    # y * tanh(softplus(y)) == y * (1 - 2 / ((1 + e^y)**2 + 1)); one EUP exp +
    # one EUP approx reciprocal, inf-safe for large |y| in f32.
    e = jnp.exp(y)
    u = (1.0 + e) * (1.0 + e)
    return y * (1.0 - 2.0 * pl.reciprocal(u + 1.0, approx=True))


def _dot(a, b):
    # Operands are already in _MM_DTYPE (cast hoisted to the wrapper / reused
    # casts inside the kernel); accumulate in f32 on the MXU.
    return jnp.dot(a, b, preferred_element_type=jnp.float32)


# ----------------------------------------------------------------------------
# Pallas kernels
# ----------------------------------------------------------------------------
def _conv_gemm_kernel(x_ref, w_ref, s_ref, b_ref, o_ref):
    """One BasicConv row-tile: (im2col'd) conv as a single GEMM + folded BN + Mish."""
    y = _dot(x_ref[...], w_ref[...]) * s_ref[...] + b_ref[...]
    o_ref[...] = _mish(y).astype(o_ref.dtype)


def _split_kernel(t_ref, w12_ref, s12_ref, b12_ref, wr1_ref, sr1_ref, br1_ref,
                  t1_ref, t2_ref, h_ref):
    """Fused split_conv1+split_conv2 (packed into one GEMM) and Resblock's 1x1 conv."""
    cp = t1_ref.shape[-1]
    a12 = _mish(_dot(t_ref[...], w12_ref[...]) * s12_ref[...] + b12_ref[...])
    t1_ref[...] = a12[:, :cp].astype(t1_ref.dtype)
    t2b = a12[:, cp:].astype(_MM_DTYPE)          # cast once, reuse for store + GEMM
    t2_ref[...] = t2b.astype(t2_ref.dtype)
    h = _mish(_dot(t2b, wr1_ref[...]) * sr1_ref[...] + br1_ref[...])
    h_ref[...] = h.astype(h_ref.dtype)


def _res_out_kernel(hc_ref, t2_ref, wr2_ref, sr2_ref, br2_ref,
                    wbo_ref, sbo_ref, bbo_ref, o_ref):
    """Fused Resblock 3x3 conv (im2col GEMM) + residual add + block-out 1x1 conv."""
    y = _mish(_dot(hc_ref[...], wr2_ref[...]) * sr2_ref[...] + br2_ref[...])
    y = y + t2_ref[...].astype(jnp.float32)
    z = _mish(_dot(y.astype(_MM_DTYPE), wbo_ref[...]) * sbo_ref[...] + bbo_ref[...])
    o_ref[...] = z.astype(o_ref.dtype)


def _cat_last_kernel(a_ref, b_ref, wa_ref, wb_ref, s_ref, bias_ref, o_ref):
    """Fused torch.cat([t1, t2], dim=1) + last 1x1 conv: sum of two GEMMs."""
    acc = _dot(a_ref[...], wa_ref[...]) + _dot(b_ref[...], wb_ref[...])
    o_ref[...] = _mish(acc * s_ref[...] + bias_ref[...]).astype(o_ref.dtype)


# ----------------------------------------------------------------------------
# Wrapper-side layout helpers (padding / im2col are layout glue, not compute)
# ----------------------------------------------------------------------------
def _round_up(a, b):
    return -(-a // b) * b


def _choose_tm(m):
    # >=2 row tiles whenever possible (v7x megacore sharding), multiple of 16
    # for bf16 sublane packing, capped at 512 rows to stay well inside VMEM.
    half = -(-m // 2)
    return min(512, _round_up(max(half, 16), 16))


def _act_spec(tm, c):
    return pl.BlockSpec((tm, c), lambda i: (i, 0))


def _const_spec(arr):
    return pl.BlockSpec(arr.shape, lambda i: (0, 0))


def _ce(flops, transcendentals, arrays, out_bytes):
    by = sum(int(a.size) * a.dtype.itemsize for a in arrays) + int(out_bytes)
    return pl.CostEstimate(flops=int(flops), transcendentals=int(transcendentals),
                           bytes_accessed=by)


def _pad_channels(x, cp):
    pad = cp - x.shape[-1]
    if pad == 0:
        return x
    cfg = [(0, 0)] * (x.ndim - 1) + [(0, pad)]
    return jnp.pad(x, cfg)


def _pad_rows(x, mp):
    if x.shape[0] == mp:
        return x
    return jnp.pad(x, ((0, mp - x.shape[0]), (0, 0)))


def _pack_w(w, cinp, coutp):
    """[KH,KW,Cin,Cout] -> zero-padded [KH*KW*cinp, coutp] (ky,kx,c order), bf16."""
    kh, kw, cin, cout = w.shape
    wp = jnp.zeros((kh, kw, cinp, coutp), jnp.float32)
    wp = wp.at[:, :, :cin, :cout].set(w.astype(jnp.float32))
    return wp.reshape(kh * kw * cinp, coutp).astype(_MM_DTYPE)


def _pack_sb(scale, bias, coutp):
    cout = scale.shape[0]
    s = jnp.zeros((1, coutp), jnp.float32).at[0, :cout].set(scale.astype(jnp.float32))
    b = jnp.zeros((1, coutp), jnp.float32).at[0, :cout].set(bias.astype(jnp.float32))
    return s, b


def _im2col(x, kh, kw, stride, pad):
    """Patch stack [N*Ho*Wo, kh*kw*C] in (ky, kx, c) order, matching _pack_w."""
    n, h, w, c = x.shape
    ho = (h + 2 * pad - kh) // stride + 1
    wo = (w + 2 * pad - kw) // stride + 1
    xp = jnp.pad(x, ((0, 0), (pad, pad), (pad, pad), (0, 0)))
    cols = []
    for ky in range(kh):
        for kx in range(kw):
            cols.append(xp[:, ky:ky + (ho - 1) * stride + 1:stride,
                           kx:kx + (wo - 1) * stride + 1:stride, :])
    xc = jnp.concatenate(cols, axis=-1)
    return xc.reshape(n * ho * wo, kh * kw * c), ho, wo


# ----------------------------------------------------------------------------
# Resblock_body forward (first=True configuration)
# ----------------------------------------------------------------------------
def resblock_body_forward(x_nchw, params):
    n, cin, h, w = x_nchw.shape
    cout = params["down"]["w"].shape[-1]
    chid = params["res_conv1"]["w"].shape[-1]

    cinp = _round_up(cin, _LANE)
    cp = _round_up(cout, _LANE)
    chp = _round_up(chid, _LANE)

    x = jnp.transpose(x_nchw, (0, 2, 3, 1))             # NCHW -> NHWC
    x = _pad_channels(x, cinp)

    # ---- down_sampling: 3x3 stride-2 conv as one GEMM over the im2col stack ----
    xc, ho, wo = _im2col(x, 3, 3, 2, 1)                  # [M, 9*cinp]
    m = n * ho * wo
    tm = _choose_tm(m)
    mp = _round_up(m, tm)
    grid = (mp // tm,)
    xc = _pad_rows(xc, mp).astype(_MM_DTYPE)

    w_dn = _pack_w(params["down"]["w"], cinp, cp)
    s_dn, b_dn = _pack_sb(params["down"]["scale"], params["down"]["bias"], cp)

    t = pl.pallas_call(
        _conv_gemm_kernel,
        grid=grid,
        in_specs=[_act_spec(tm, xc.shape[1]), _const_spec(w_dn),
                  _const_spec(s_dn), _const_spec(b_dn)],
        out_specs=_act_spec(tm, cp),
        out_shape=jax.ShapeDtypeStruct((mp, cp), _ACT_DTYPE),
        compiler_params=_CPARAMS,
        cost_estimate=_ce(2 * mp * xc.shape[1] * cp, 2 * mp * cp,
                          (xc, w_dn, s_dn, b_dn), mp * cp * 2),
    )(xc, w_dn, s_dn, b_dn)

    # ---- fused (split_conv1 | split_conv2) packed GEMM + Resblock 1x1 conv ----
    w_s1 = _pack_w(params["split1"]["w"], cp, cp)
    w_s2 = _pack_w(params["split2"]["w"], cp, cp)
    w_12 = jnp.concatenate([w_s1, w_s2], axis=-1)        # [cp, 2*cp]
    s_s1, b_s1 = _pack_sb(params["split1"]["scale"], params["split1"]["bias"], cp)
    s_s2, b_s2 = _pack_sb(params["split2"]["scale"], params["split2"]["bias"], cp)
    s_12 = jnp.concatenate([s_s1, s_s2], axis=-1)
    b_12 = jnp.concatenate([b_s1, b_s2], axis=-1)
    w_r1 = _pack_w(params["res_conv1"]["w"], cp, chp)
    s_r1, b_r1 = _pack_sb(params["res_conv1"]["scale"], params["res_conv1"]["bias"], chp)

    consts = (w_12, s_12, b_12, w_r1, s_r1, b_r1)
    t1, t2, hmid = pl.pallas_call(
        _split_kernel,
        grid=grid,
        in_specs=[_act_spec(tm, cp)] + [_const_spec(a) for a in consts],
        out_specs=(_act_spec(tm, cp), _act_spec(tm, cp), _act_spec(tm, chp)),
        out_shape=(jax.ShapeDtypeStruct((mp, cp), _ACT_DTYPE),
                   jax.ShapeDtypeStruct((mp, cp), _ACT_DTYPE),
                   jax.ShapeDtypeStruct((mp, chp), _ACT_DTYPE)),
        compiler_params=_CPARAMS,
        cost_estimate=_ce(2 * mp * cp * (2 * cp) + 2 * mp * cp * chp,
                          2 * mp * (2 * cp + chp),
                          (t,) + consts, mp * (2 * cp + chp) * 2),
    )(t, *consts)

    # ---- fused Resblock 3x3 conv (+residual) + block-out 1x1 conv ----
    hc, _, _ = _im2col(hmid[:m].reshape(n, ho, wo, chp), 3, 3, 1, 1)   # bf16 stack
    hc = _pad_rows(hc, mp)
    w_r2 = _pack_w(params["res_conv2"]["w"], chp, cp)
    s_r2, b_r2 = _pack_sb(params["res_conv2"]["scale"], params["res_conv2"]["bias"], cp)
    w_bo = _pack_w(params["block_out"]["w"], cp, cp)
    s_bo, b_bo = _pack_sb(params["block_out"]["scale"], params["block_out"]["bias"], cp)

    consts = (w_r2, s_r2, b_r2, w_bo, s_bo, b_bo)
    t2 = pl.pallas_call(
        _res_out_kernel,
        grid=grid,
        in_specs=[_act_spec(tm, hc.shape[1]), _act_spec(tm, cp)]
                 + [_const_spec(a) for a in consts],
        out_specs=_act_spec(tm, cp),
        out_shape=jax.ShapeDtypeStruct((mp, cp), _ACT_DTYPE),
        compiler_params=_CPARAMS,
        cost_estimate=_ce(2 * mp * hc.shape[1] * cp + 2 * mp * cp * cp,
                          4 * mp * cp,
                          (hc, t2) + consts, mp * cp * 2),
    )(hc, t2, *consts)

    # ---- fused concat + last 1x1 conv (two GEMMs summed; no cat buffer) ----
    w_last = params["last"]["w"]                         # [1, 1, 2*cout, cout]
    w_la = _pack_w(w_last[:, :, :cout, :], cp, cp)
    w_lb = _pack_w(w_last[:, :, cout:, :], cp, cp)
    s_l, b_l = _pack_sb(params["last"]["scale"], params["last"]["bias"], cp)

    out = pl.pallas_call(
        _cat_last_kernel,
        grid=grid,
        in_specs=[_act_spec(tm, cp), _act_spec(tm, cp), _const_spec(w_la),
                  _const_spec(w_lb), _const_spec(s_l), _const_spec(b_l)],
        out_specs=_act_spec(tm, cp),
        out_shape=jax.ShapeDtypeStruct((mp, cp), jnp.float32),
        compiler_params=_CPARAMS,
        cost_estimate=_ce(4 * mp * cp * cp, 2 * mp * cp,
                          (t1, t2, w_la, w_lb, s_l, b_l), mp * cp * 4),
    )(t1, t2, w_la, w_lb, s_l, b_l)

    out = out[:m, :cout].reshape(n, ho, wo, cout)
    return jnp.transpose(out, (0, 3, 1, 2)).astype(x_nchw.dtype)   # NHWC -> NCHW


# ----------------------------------------------------------------------------
# Pure-JAX f32 reference (for correctness check)
# ----------------------------------------------------------------------------
def _basic_conv_ref(x, p, stride=1):
    w = p["w"]
    pad = w.shape[0] // 2
    y = jax.lax.conv_general_dilated(
        x, w, (stride, stride), ((pad, pad), (pad, pad)),
        dimension_numbers=("NHWC", "HWIO", "NHWC"))
    y = y * p["scale"] + p["bias"]
    return y * jnp.tanh(jax.nn.softplus(y))


def resblock_body_reference(x_nchw, params):
    x = jnp.transpose(x_nchw, (0, 2, 3, 1))
    t = _basic_conv_ref(x, params["down"], stride=2)
    t1 = _basic_conv_ref(t, params["split1"])
    t2 = _basic_conv_ref(t, params["split2"])
    h = _basic_conv_ref(t2, params["res_conv1"])
    t2 = t2 + _basic_conv_ref(h, params["res_conv2"])
    t2 = _basic_conv_ref(t2, params["block_out"])
    cat = jnp.concatenate([t1, t2], axis=-1)
    out = _basic_conv_ref(cat, params["last"])
    return jnp.transpose(out, (0, 3, 1, 2))


# ----------------------------------------------------------------------------
# Deterministic parameter init (Conv weight + BN folded into scale/bias)
# ----------------------------------------------------------------------------
def init_basic_conv(key, cin, cout, k):
    kw, kg, kb, km, kv = jax.random.split(key, 5)
    w = 0.1 * jax.random.normal(kw, (k, k, cin, cout), jnp.float32)
    gamma = 1.0 + 0.1 * jax.random.normal(kg, (cout,), jnp.float32)
    beta = 0.1 * jax.random.normal(kb, (cout,), jnp.float32)
    running_mean = 0.1 * jax.random.normal(km, (cout,), jnp.float32)
    running_var = 1.0 + 0.1 * jax.random.uniform(kv, (cout,), jnp.float32)
    eps = 1e-5
    scale = gamma / jnp.sqrt(running_var + eps)
    bias = beta - running_mean * scale
    return dict(w=w, scale=scale, bias=bias)


if __name__ == "__main__":
    key = jax.random.PRNGKey(0)
    k_in, *pkeys = jax.random.split(key, 9)

    in_channels, out_channels = 4, 8
    x = jax.random.normal(k_in, (2, in_channels, 16, 16), jnp.float32)   # NCHW like PyTorch

    # Resblock_body(in_channels=4, out_channels=8, num_blocks=1, first=True)
    params = {
        "down":      init_basic_conv(pkeys[0], in_channels, out_channels, 3),
        "split1":    init_basic_conv(pkeys[1], out_channels, out_channels, 1),
        "split2":    init_basic_conv(pkeys[2], out_channels, out_channels, 1),
        "res_conv1": init_basic_conv(pkeys[3], out_channels, out_channels // 2, 1),
        "res_conv2": init_basic_conv(pkeys[4], out_channels // 2, out_channels, 3),
        "block_out": init_basic_conv(pkeys[5], out_channels, out_channels, 1),
        "last":      init_basic_conv(pkeys[6], out_channels * 2, out_channels, 1),
    }

    out = jax.block_until_ready(resblock_body_forward(x, params))
    ref = jax.block_until_ready(resblock_body_reference(x, params))

    assert out.shape == (2, out_channels, 8, 8), out.shape
    # bf16 weights/activations on the MXU (f32 accumulation) vs. a pure-f32
    # reference: allow a few-percent (of max |ref|) absolute deviation.
    err = float(jnp.max(jnp.abs(out - ref)))
    ref_scale = float(jnp.max(jnp.abs(ref)))
    assert err <= 3e-2 * ref_scale + 3e-3, (err, ref_scale)
    print("KERNEL_OK")
</pallas_src>

<mosaic_0001>
module attributes {stable_mosaic.version = 11 : i64} {
  func.func @_conv_gemm_kernel(%arg0: i32, %arg1: memref<64x1152xbf16, #tpu.memory_space<vmem>>, %arg2: memref<1152x128xbf16, #tpu.memory_space<vmem>>, %arg3: memref<1x128xf32, #tpu.memory_space<vmem>>, %arg4: memref<1x128xf32, #tpu.memory_space<vmem>>, %arg5: memref<64x128xbf16, #tpu.memory_space<vmem>>) attributes {dimension_semantics = [#tpu.dimension_semantics<parallel>], iteration_bounds = array<i64: 2>, scalar_prefetch = 0 : i64, scratch_operands = 0 : i64, tpu.core_type = #tpu.core_type<tc>, window_params = [{transform_indices = @transform_0, window_bounds = array<i64: 64, 1152>}, {pipeline_mode = #tpu.pipeline_mode<synchronous>, transform_indices = @transform_1, window_bounds = array<i64: 1152, 128>}, {pipeline_mode = #tpu.pipeline_mode<synchronous>, transform_indices = @transform_2, window_bounds = array<i64: 1, 128>}, {pipeline_mode = #tpu.pipeline_mode<synchronous>, transform_indices = @transform_3, window_bounds = array<i64: 1, 128>}, {transform_indices = @transform_4, window_bounds = array<i64: 64, 128>}]} {
    %c0 = arith.constant 0 : index
    %c0_0 = arith.constant 0 : index
    %0 = vector.load %arg1[%c0, %c0_0] : memref<64x1152xbf16, #tpu.memory_space<vmem>>, vector<64x1152xbf16>
    %c0_1 = arith.constant 0 : index
    %c0_2 = arith.constant 0 : index
    %1 = vector.load %arg2[%c0_1, %c0_2] : memref<1152x128xbf16, #tpu.memory_space<vmem>>, vector<1152x128xbf16>
    %cst = arith.constant dense<0.000000e+00> : vector<64x128xf32>
    %2 = tpu.matmul %0, %1, %cst {dimension_numbers = #tpu.dot_dimension_numbers<[1], [0], [0], [1], [0, 0, 1, 1], [], []>} : vector<64x1152xbf16>, vector<1152x128xbf16>, vector<64x128xf32> -> vector<64x128xf32>
    %c0_3 = arith.constant 0 : index
    %c0_4 = arith.constant 0 : index
    %3 = vector.load %arg3[%c0_3, %c0_4] : memref<1x128xf32, #tpu.memory_space<vmem>>, vector<1x128xf32>
    %4 = vector.broadcast %3 : vector<1x128xf32> to vector<64x128xf32>
    %5 = arith.mulf %2, %4 : vector<64x128xf32>
    %c0_5 = arith.constant 0 : index
    %c0_6 = arith.constant 0 : index
    %6 = vector.load %arg4[%c0_5, %c0_6] : memref<1x128xf32, #tpu.memory_space<vmem>>, vector<1x128xf32>
    %7 = vector.broadcast %6 : vector<1x128xf32> to vector<64x128xf32>
    %8 = arith.addf %5, %7 : vector<64x128xf32>
    %9 = math.exp %8 : vector<64x128xf32>
    %cst_7 = arith.constant 1.000000e+00 : f32
    %10 = vector.broadcast %cst_7 : f32 to vector<64x128xf32>
    %11 = arith.addf %10, %9 : vector<64x128xf32>
    %cst_8 = arith.constant 1.000000e+00 : f32
    %12 = vector.broadcast %cst_8 : f32 to vector<64x128xf32>
    %13 = arith.addf %12, %9 : vector<64x128xf32>
    %14 = arith.mulf %11, %13 : vector<64x128xf32>
    %cst_9 = arith.constant 1.000000e+00 : f32
    %15 = vector.broadcast %cst_9 : f32 to vector<64x128xf32>
    %16 = arith.addf %14, %15 : vector<64x128xf32>
    %17 = tpu.reciprocal %16 {approx = true} : vector<64x128xf32> -> vector<64x128xf32>
    %cst_10 = arith.constant 2.000000e+00 : f32
    %18 = vector.broadcast %cst_10 : f32 to vector<64x128xf32>
    %19 = arith.mulf %18, %17 : vector<64x128xf32>
    %cst_11 = arith.constant 1.000000e+00 : f32
    %20 = vector.broadcast %cst_11 : f32 to vector<64x128xf32>
    %21 = arith.subf %20, %19 : vector<64x128xf32>
    %22 = arith.mulf %8, %21 : vector<64x128xf32>
    %23 = arith.truncf %22 : vector<64x128xf32> to vector<64x128xbf16>
    %c0_12 = arith.constant 0 : index
    %c0_13 = arith.constant 0 : index
    %24 = vector.load %arg5[%c0_12, %c0_13] : memref<64x128xbf16, #tpu.memory_space<vmem>>, vector<64x128xbf16>
    tpu.vector_store %arg5[%c0_12, %c0_13], %23 {strides = array<i32>} : memref<64x128xbf16, #tpu.memory_space<vmem>>, vector<64x128xbf16>,
    return
  }
  func.func @transform_0(%arg0: i32) -> (i32, i32) {
    %c0_i32 = arith.constant 0 : i32
    %c0_i32_0 = arith.constant 0 : i32
    return %arg0, %c0_i32 : i32, i32
  }
  func.func @transform_1(%arg0: i32) -> (i32, i32) {
    %c0_i32 = arith.constant 0 : i32
    %c0_i32_0 = arith.constant 0 : i32
    %c0_i32_1 = arith.constant 0 : i32
    return %c0_i32, %c0_i32_0 : i32, i32
  }
  func.func @transform_2(%arg0: i32) -> (i32, i32) {
    %c0_i32 = arith.constant 0 : i32
    %c0_i32_0 = arith.constant 0 : i32
    %c0_i32_1 = arith.constant 0 : i32
    return %c0_i32, %c0_i32_0 : i32, i32
  }
  func.func @transform_3(%arg0: i32) -> (i32, i32) {
    %c0_i32 = arith.constant 0 : i32
    %c0_i32_0 = arith.constant 0 : i32
    %c0_i32_1 = arith.constant 0 : i32
    return %c0_i32, %c0_i32_0 : i32, i32
  }
  func.func @transform_4(%arg0: i32) -> (i32, i32) {
    %c0_i32 = arith.constant 0 : i32
    %c0_i32_0 = arith.constant 0 : i32
    return %arg0, %c0_i32 : i32, i32
  }
}

</mosaic_0001>

<llo_original>
// kernel: tpu_custom_call.1
$region0: #{tpu_custom_call.1}
  #allocation0 [shape = 'u32[]', space=smem, size = 0x4, offset = 0x4, fixed_abs, tag = 'smem constant byte address 0x4 - core index']
  #allocation1 [shape = 'u32[72,128]{1,0:T(1,128)}', space=vmem, size = 0x9000, scoped, tag = 'internal scratch']
  %s0 = inlined_call_operand.hbm [shape: bf16[128,1152], index: 0, kind: input, shape index: {}]
  %s1 = inlined_call_operand.hbm [shape: bf16[1152,128], index: 1, kind: input, shape index: {}]
  %s2 = inlined_call_operand.vmem [shape: f32[1,128], index: 2, kind: input, shape index: {}]
  %s3 = inlined_call_operand.vmem [shape: f32[1,128], index: 3, kind: input, shape index: {}]
  %s4 = inlined_call_operand.hbm [shape: bf16[128,128], index: 4, kind: output, shape index: {}]
  %s5 = sld [smem:[#allocation0]]
  $region57: #{tpu_custom_call.1} parent=0
    _
  %s7 = ssub.s32 1, %s5
  %s8 = scalar_select 0, %s7, %s5
  $region1: #{tpu_custom_call.1} parent=0
    #allocation2 [shape = 'u8[294912]{0}', space=vmem, size = 0x48000, scoped, tag = 'input window, operand 0']
    #allocation3 [shape = 's32[2]{0}', space=sflag, size = 0x8, scoped, tag = 'scoped memory for tpu_custom_call.1']
    #allocation4 [shape = 's32[2]{0}', space=sflag, size = 0x8, scoped, tag = 'scoped memory for tpu_custom_call.1']
    #allocation5 [shape = 'u8[294912]{0}', space=vmem, size = 0x48000, scoped, tag = 'input window, operand 1, single buffered']
    #allocation6 [shape = 's32[1]{0}', space=sflag, size = 0x4, scoped, tag = 'scoped memory for tpu_custom_call.1']
    #allocation7 [shape = 'u8[32768]{0}', space=vmem, size = 0x8000, scoped, tag = 'output window, operand 0']
    %9 = vsyncpa [#allocation3], 0
    %s10 = scalar_lea.sflag [#allocation3], 1
    %11 = vsyncpa %s10, 0
    %12 = vsyncpa [#allocation6], 0
    %13 = vsyncpa [#allocation4], 0
    %s14 = scalar_lea.sflag [#allocation4], 1
    %15 = vsyncpa %s14, 0
    loop: start=0, step=1, limit=4
    $region2: #{tpu_custom_call.1} parent=1 // loop_pre_header
      _
    $region3: #{tpu_custom_call.1} parent=1 // loop_header
      %s17 = sphi 0, %s21
      %p18 = scmp.ge.s32.totalorder %s17, 4
      %s27 = sphi 0, %s29
      %s30 = sphi 0, %s27
      %s31 = sphi 0, %s30
      %s47 = sphi 0, %s31
      %s51 = sphi 0, %s51
      %s53 = sphi 0, %s51
      %s54 = sphi 0, %s53
      %s68 = sphi 0, %s54
      %s72 = sphi 0, %s72
      %s74 = sphi 0, %s72
      %s75 = sphi 0, %s74
      %s89 = sphi 0, %s75
      %s93 = sphi 0, %s93
      %s95 = sphi 0, %s93
      %s96 = sphi 0, %s95
      %s110 = sphi 0, %s96
      %s116 = sphi 0, %s118
      %s119 = sphi 0, %s116
      %s120 = sphi 0, %s119
      %s136 = sphi 0, %s120
    $region4: #{tpu_custom_call.1} parent=1 // loop_header_branch
      %20 = sbr.rel (%p18) target = $region8
    $region5: #{tpu_custom_call.1} parent=1 // loop_body
      %s22 = ssub.s32 %s17, 1
      %s23 = ssub.s32 %s17, 2
      %s24 = sadd.s32 %s17, 1
      %s25 = ssub.s32 %s17, %s24
      %p26 = scmp.eq.s32.totalorder %s25, 0
      %s28 = sadd.s32 %s27, 1
      %s29 = scalar_select %p26, %s27, %s28
      %p32 = pneg %p26
      %p33 = scmp.eq.s32.totalorder %s17, 1
      %p34 = por %p32, %p33
      %p35 = scmp.ne.s32.totalorder %s27, %s30
      %p36 = scmp.eq.s32.totalorder %s17, 0
      %p37 = por %p35, %p36
      %p38 = scmp.ne.s32.totalorder %s27, %s30
      %p39 = scmp.eq.s32.totalorder %s22, 1
      %p40 = por %p38, %p39
      %p41 = scmp.ne.s32.totalorder %s30, %s31
      %p42 = scmp.eq.s32.totalorder %s22, 0
      %p43 = por %p41, %p42
      %p44 = scmp.ne.s32.totalorder %s30, %s31
      %p45 = scmp.eq.s32.totalorder %s23, 1
      %p46 = por %p44, %p45
      %p48 = scmp.ne.s32.totalorder %s31, %s47
      %p49 = scmp.eq.s32.totalorder %s23, 0
      %p50 = por %p48, %p49
      %s52 = sadd.s32 %s51, 1
      %p55 = scmp.eq.s32.totalorder %s17, 1
      %p56 = scmp.ne.s32.totalorder %s51, %s53
      %p57 = scmp.eq.s32.totalorder %s17, 0
      %p58 = por %p56, %p57
      %p59 = scmp.ne.s32.totalorder %s51, %s53
      %p60 = scmp.eq.s32.totalorder %s22, 1
      %p61 = por %p59, %p60
      %p62 = scmp.ne.s32.totalorder %s53, %s54
      %p63 = scmp.eq.s32.totalorder %s22, 0
      %p64 = por %p62, %p63
      %p65 = scmp.ne.s32.totalorder %s53, %s54
      %p66 = scmp.eq.s32.totalorder %s23, 1
      %p67 = por %p65, %p66
      %p69 = scmp.ne.s32.totalorder %s54, %s68
      %p70 = scmp.eq.s32.totalorder %s23, 0
      %p71 = por %p69, %p70
      %s73 = sadd.s32 %s72, 1
      %p76 = scmp.eq.s32.totalorder %s17, 1
      %p77 = scmp.ne.s32.totalorder %s72, %s74
      %p78 = scmp.eq.s32.totalorder %s17, 0
      %p79 = por %p77, %p78
      %p80 = scmp.ne.s32.totalorder %s72, %s74
      %p81 = scmp.eq.s32.totalorder %s22, 1
      %p82 = por %p80, %p81
      %p83 = scmp.ne.s32.totalorder %s74, %s75
      %p84 = scmp.eq.s32.totalorder %s22, 0
      %p85 = por %p83, %p84
      %p86 = scmp.ne.s32.totalorder %s74, %s75
      %p87 = scmp.eq.s32.totalorder %s23, 1
      %p88 = por %p86, %p87
      %p90 = scmp.ne.s32.totalorder %s75, %s89
      %p91 = scmp.eq.s32.totalorder %s23, 0
      %p92 = por %p90, %p91
      %s94 = sadd.s32 %s93, 1
      %p97 = scmp.eq.s32.totalorder %s17, 1
      %p98 = scmp.ne.s32.totalorder %s93, %s95
      %p99 = scmp.eq.s32.totalorder %s17, 0
      %p100 = por %p98, %p99
      %p101 = scmp.ne.s32.totalorder %s93, %s95
      %p102 = scmp.eq.s32.totalorder %s22, 1
      %p103 = por %p101, %p102
      %p104 = scmp.ne.s32.totalorder %s95, %s96
      %p105 = scmp.eq.s32.totalorder %s22, 0
      %p106 = por %p104, %p105
      %p107 = scmp.ne.s32.totalorder %s95, %s96
      %p108 = scmp.eq.s32.totalorder %s23, 1
      %p109 = por %p107, %p108
      %p111 = scmp.ne.s32.totalorder %s96, %s110
      %p112 = scmp.eq.s32.totalorder %s23, 0
      %p113 = por %p111, %p112
      %s114 = ssub.s32 %s17, %s24
      %p115 = scmp.eq.s32.totalorder %s114, 0
      %s117 = sadd.s32 %s116, 1
      %s118 = scalar_select %p115, %s116, %s117
      %p121 = pneg %p115
      %p122 = scmp.eq.s32.totalorder %s17, 1
      %p123 = por %p121, %p122
      %p124 = scmp.ne.s32.totalorder %s116, %s119
      %p125 = scmp.eq.s32.totalorder %s17, 0
      %p126 = por %p124, %p125
      %p127 = scmp.ne.s32.totalorder %s116, %s119
      %p128 = scmp.eq.s32.totalorder %s22, 1
      %p129 = por %p127, %p128
      %p130 = scmp.ne.s32.totalorder %s119, %s120
      %p131 = scmp.eq.s32.totalorder %s22, 0
      %p132 = por %p130, %p131
      %p133 = scmp.ne.s32.totalorder %s119, %s120
      %p134 = scmp.eq.s32.totalorder %s23, 1
      %p135 = por %p133, %p134
      %p137 = scmp.ne.s32.totalorder %s120, %s136
      %p138 = scmp.eq.s32.totalorder %s23, 0
      %p139 = por %p137, %p138
      %p140 = scmp.le.s32.totalorder 1, %s17
      %p141 = scmp.lt.s32.totalorder %s17, 3
      %p142 = pnand %p140, %p141
      %p143 = pneg %p142
      // Predicated region
      $region9: #{tpu_custom_call.1} parent=5 // pred_check
        _
      $region10: #{tpu_custom_call.1} parent=5 // pred_check_branch
        %145 = sbr.rel (%p142) target = $region12
      $region11: #{tpu_custom_call.1} parent=5 // pred_region
        %s146 = ssub.s32 %s17, 1
        // Predicated region
        $region13: #{tpu_custom_call.1} parent=11 // pred_check
          %p147 = pneg %p64
        $region14: #{tpu_custom_call.1} parent=11 // pred_check_branch
          %149 = sbr.rel (%p147) target = $region16
        $region15: #{tpu_custom_call.1} parent=11 // pred_region
          %151 = vsyncadd [#allocation6], 0
          %s152 = sshll.u32 %s1, 4
          %s153 = int_to_ptr.hbm [resolvable:$true] %s152
          %s154 = sshll.u32 [#allocation5], 4
          %s155 = int_to_ptr.vmem [resolvable:$true] %s154
          %160 = dma.hbm_to_vmem [thread:$0]  %s153, 9216, %s155, [#allocation6], 64, 64, 4
        $region16: #{tpu_custom_call.1} parent=11 // pred_fallthru
          _
        // Predicated region
        $region17: #{tpu_custom_call.1} parent=11 // pred_check
          %p161 = pneg %p85
        $region18: #{tpu_custom_call.1} parent=11 // pred_check_branch
          %163 = sbr.rel (%p161) target = $region20
        $region19: #{tpu_custom_call.1} parent=11 // pred_region
          _
        $region20: #{tpu_custom_call.1} parent=11 // pred_fallthru
          _
        // Predicated region
        $region21: #{tpu_custom_call.1} parent=11 // pred_check
          %p164 = pneg %p106
        $region22: #{tpu_custom_call.1} parent=11 // pred_check_branch
          %166 = sbr.rel (%p164) target = $region24
        $region23: #{tpu_custom_call.1} parent=11 // pred_region
          _
        $region24: #{tpu_custom_call.1} parent=11 // pred_fallthru
          _
      $region12: #{tpu_custom_call.1} parent=5 // pred_fallthru
        _
      %p167 = scmp.lt.s32.totalorder %s17, 2
      // Predicated region
      $region25: #{tpu_custom_call.1} parent=5 // pred_check
        %p168 = pneg %p167
      $region26: #{tpu_custom_call.1} parent=5 // pred_check_branch
        %170 = sbr.rel (%p168) target = $region28
      $region27: #{tpu_custom_call.1} parent=5 // pred_region
        // Predicated region
        $region29: #{tpu_custom_call.1} parent=27 // pred_check
          %p171 = pneg %p37
        $region30: #{tpu_custom_call.1} parent=27 // pred_check_branch
          %173 = sbr.rel (%p171) target = $region32
        $region31: #{tpu_custom_call.1} parent=27 // pred_region
          %s174 = sand.u32 %s27, 1
          %s175 = scalar_lea.sflag [#allocation3], %s174
          %s176 = sand.u32 %s27, 1
          %s177 = smul.addr %s176, 288
          %s178 = scalar_lea.vmem [#allocation2], %s177
          %s179 = smul.u32 8, %s17
          %181 = vsyncadd %s175, 0
          %s182 = smul.addr %s179, 9
          %s183 = smul.addr %s182, 4
          %s184 = scalar_lea.hbm %s0, %s183
          %s185 = sshll.u32 %s184, 4
          %s186 = int_to_ptr.hbm [resolvable:$true] %s185
          %s187 = sshll.u32 %s178, 4
          %s188 = int_to_ptr.vmem [resolvable:$true] %s187
          %193 = dma.hbm_to_vmem [thread:$0]  %s186, 4608, %s188, %s175, 576, 576, 36
        $region32: #{tpu_custom_call.1} parent=27 // pred_fallthru
          _
      $region28: #{tpu_custom_call.1} parent=5 // pred_fallthru
        _
      %p194 = scmp.le.s32.totalorder 1, %s17
      %p195 = scmp.lt.s32.totalorder %s17, 3
      %p196 = pnand %p194, %p195
      %p197 = pneg %p196
      // Predicated region
      $region33: #{tpu_custom_call.1} parent=5 // pred_check
        _
      $region34: #{tpu_custom_call.1} parent=5 // pred_check_branch
        %199 = sbr.rel (%p196) target = $region36
      $region35: #{tpu_custom_call.1} parent=5 // pred_region
        %s200 = ssub.s32 %s17, 1
        %s201 = sand.u32 %s30, 1
        %s202 = scalar_lea.sflag [#allocation3], %s201
        %s203 = sand.u32 %s30, 1
        %s204 = smul.addr %s203, 288
        %s205 = scalar_lea.vmem [#allocation2], %s204
        // Predicated region
        $region37: #{tpu_custom_call.1} parent=35 // pred_check
          %p206 = pneg %p43
        $region38: #{tpu_custom_call.1} parent=35 // pred_check_branch
          %208 = sbr.rel (%p206) target = $region40
        $region39: #{tpu_custom_call.1} parent=35 // pred_region
          %210 = dma.done %s202, 4608
        $region40: #{tpu_custom_call.1} parent=35 // pred_fallthru
          _
        // Predicated region
        $region41: #{tpu_custom_call.1} parent=35 // pred_check
          %p211 = pneg %p64
        $region42: #{tpu_custom_call.1} parent=35 // pred_check_branch
          %213 = sbr.rel (%p211) target = $region44
        $region43: #{tpu_custom_call.1} parent=35 // pred_region
          %215 = dma.done [#allocation6], 9216
        $region44: #{tpu_custom_call.1} parent=35 // pred_fallthru
          _
        %s216 = sand.u32 %s30, 1
        %s217 = scalar_lea.sflag [#allocation3], %s216
        %s218 = sand.u32 %s30, 1
        %s219 = smul.addr %s218, 288
        %s220 = scalar_lea.vmem [#allocation2], %s219
        %p221 = pneg %p43
        %p222 = pneg %p40
        %p223 = pneg %p64
        %p224 = pneg %p61
        %p225 = pneg %p85
        %p226 = pneg %p82
        %p227 = pneg %p106
        %p228 = pneg %p103
        %p229 = pneg %p132
        %p230 = pneg %p129
        %s231 = sand.u32 %s119, 1
        %s232 = scalar_lea.sflag [#allocation4], %s231
        %s233 = sand.u32 %s119, 1
        %s234 = smul.addr %s233, 32
        %s235 = scalar_lea.vmem [#allocation7], %s234
        %s236 = smul.u32 8, %s22
        %s237 = smul.u32 8, %s22
        %v238 = vld [vmem:[%s205] sm:$0xff]
        %v239 = vld [vmem:[%s205 + $0x8] sm:$0xff]
        %v240 = vld [vmem:[%s205 + $0x10] sm:$0xff]
        %v241 = vld [vmem:[%s205 + $0x18] sm:$0xff]
        %v242 = vld [vmem:[%s205 + $0x20] sm:$0xf]
        %v243 = vld [vmem:[%s205 + $0x24] sm:$0xff]
        %v244 = vld [vmem:[%s205 + $0x2c] sm:$0xff]
        %v245 = vld [vmem:[%s205 + $0x34] sm:$0xff]
        %v246 = vld [vmem:[%s205 + $0x3c] sm:$0xff]
        %v247 = vld [vmem:[%s205 + $0x44] sm:$0xf]
        %v248 = vld [vmem:[%s205 + $0x48] sm:$0xff]
        %v249 = vld [vmem:[%s205 + $0x50] sm:$0xff]
        %v250 = vld [vmem:[%s205 + $0x58] sm:$0xff]
        %v251 = vld [vmem:[%s205 + $0x60] sm:$0xff]
        %v252 = vld [vmem:[%s205 + $0x68] sm:$0xf]
        %v253 = vld [vmem:[%s205 + $0x6c] sm:$0xff]
        %v254 = vld [vmem:[%s205 + $0x74] sm:$0xff]
        %v255 = vld [vmem:[%s205 + $0x7c] sm:$0xff]
        %v256 = vld [vmem:[%s205 + $0x84] sm:$0xff]
        %v257 = vld [vmem:[%s205 + $0x8c] sm:$0xf]
        %v258 = vld [vmem:[%s205 + $0x90] sm:$0xff]
        %v259 = vld [vmem:[%s205 + $0x98] sm:$0xff]
        %v260 = vld [vmem:[%s205 + $0xa0] sm:$0xff]
        %v261 = vld [vmem:[%s205 + $0xa8] sm:$0xff]
        %v262 = vld [vmem:[%s205 + $0xb0] sm:$0xf]
        %v263 = vld [vmem:[%s205 + $0xb4] sm:$0xff]
        %v264 = vld [vmem:[%s205 + $0xbc] sm:$0xff]
        %v265 = vld [vmem:[%s205 + $0xc4] sm:$0xff]
        %v266 = vld [vmem:[%s205 + $0xcc] sm:$0xff]
        %v267 = vld [vmem:[%s205 + $0xd4] sm:$0xf]
        %v268 = vld [vmem:[%s205 + $0xd8] sm:$0xff]
        %v269 = vld [vmem:[%s205 + $0xe0] sm:$0xff]
        %v270 = vld [vmem:[%s205 + $0xe8] sm:$0xff]
        %v271 = vld [vmem:[%s205 + $0xf0] sm:$0xff]
        %v272 = vld [vmem:[%s205 + $0xf8] sm:$0xf]
        %v273 = vld [vmem:[%s205 + $0xfc] sm:$0xff]
        %v274 = vld [vmem:[%s205 + $0x104] sm:$0xff]
        %v275 = vld [vmem:[%s205 + $0x10c] sm:$0xff]
        %v276 = vld [vmem:[%s205 + $0x114] sm:$0xff]
        %v277 = vld [vmem:[%s205 + $0x11c] sm:$0xf]
        %v278 = vld [vmem:[#allocation5] sm:$0xf]
        %v279 = vld [vmem:[#allocation5 + $0x4] sm:$0xf]
        %v280 = vld [vmem:[#allocation5 + $0x8] sm:$0xf]
        %v281 = vld [vmem:[#allocation5 + $0xc] sm:$0xf]
        %v282 = vld [vmem:[#allocation5 + $0x10] sm:$0xf]
        %v283 = vld [vmem:[#allocation5 + $0x14] sm:$0xf]
        %v284 = vld [vmem:[#allocation5 + $0x18] sm:$0xf]
        %v285 = vld [vmem:[#allocation5 + $0x1c] sm:$0xf]
        %v286 = vld [vmem:[#allocation5 + $0x20] sm:$0xf]
        %v287 = vld [vmem:[#allocation5 + $0x24] sm:$0xf]
        %v288 = vld [vmem:[#allocation5 + $0x28] sm:$0xf]
        %v289 = vld [vmem:[#allocation5 + $0x2c] sm:$0xf]
        %v290 = vld [vmem:[#allocation5 + $0x30] sm:$0xf]
        %v291 = vld [vmem:[#allocation5 + $0x34] sm:$0xf]
        %v292 = vld [vmem:[#allocation5 + $0x38] sm:$0xf]
        %v293 = vld [vmem:[#allocation5 + $0x3c] sm:$0xf]
        %v294 = vld [vmem:[#allocation5 + $0x40] sm:$0xf]
        %v295 = vld [vmem:[#allocation5 + $0x44] sm:$0xf]
        %v296 = vld [vmem:[#allocation5 + $0x48] sm:$0xf]
        %v297 = vld [vmem:[#allocation5 + $0x4c] sm:$0xf]
        %v298 = vld [vmem:[#allocation5 + $0x50] sm:$0xf]
        %v299 = vld [vmem:[#allocation5 + $0x54] sm:$0xf]
        %v300 = vld [vmem:[#allocation5 + $0x58] sm:$0xf]
        %v301 = vld [vmem:[#allocation5 + $0x5c] sm:$0xf]
        %v302 = vld [vmem:[#allocation5 + $0x60] sm:$0xf]
        %v303 = vld [vmem:[#allocation5 + $0x64] sm:$0xf]
        %v304 = vld [vmem:[#allocation5 + $0x68] sm:$0xf]
        %v305 = vld [vmem:[#allocation5 + $0x6c] sm:$0xf]
        %v306 = vld [vmem:[#allocation5 + $0x70] sm:$0xf]
        %v307 = vld [vmem:[#allocation5 + $0x74] sm:$0xf]
        %v308 = vld [vmem:[#allocation5 + $0x78] sm:$0xf]
        %v309 = vld [vmem:[#allocation5 + $0x7c] sm:$0xf]
        %v310 = vld [vmem:[#allocation5 + $0x80] sm:$0xf]
        %v311 = vld [vmem:[#allocation5 + $0x84] sm:$0xf]
        %v312 = vld [vmem:[#allocation5 + $0x88] sm:$0xf]
        %v313 = vld [vmem:[#allocation5 + $0x8c] sm:$0xf]
        %v314 = vld [vmem:[#allocation5 + $0x90] sm:$0xf]
        %v315 = vld [vmem:[#allocation5 + $0x94] sm:$0xf]
        %v316 = vld [vmem:[#allocation5 + $0x98] sm:$0xf]
        %v317 = vld [vmem:[#allocation5 + $0x9c] sm:$0xf]
        %v318 = vld [vmem:[#allocation5 + $0xa0] sm:$0xf]
        %v319 = vld [vmem:[#allocation5 + $0xa4] sm:$0xf]
        %v320 = vld [vmem:[#allocation5 + $0xa8] sm:$0xf]
        %v321 = vld [vmem:[#allocation5 + $0xac] sm:$0xf]
        %v322 = vld [vmem:[#allocation5 + $0xb0] sm:$0xf]
        %v323 = vld [vmem:[#allocation5 + $0xb4] sm:$0xf]
        %v324 = vld [vmem:[#allocation5 + $0xb8] sm:$0xf]
        %v325 = vld [vmem:[#allocation5 + $0xbc] sm:$0xf]
        %v326 = vld [vmem:[#allocation5 + $0xc0] sm:$0xf]
        %v327 = vld [vmem:[#allocation5 + $0xc4] sm:$0xf]
        %v328 = vld [vmem:[#allocation5 + $0xc8] sm:$0xf]
        %v329 = vld [vmem:[#allocation5 + $0xcc] sm:$0xf]
        %v330 = vld [vmem:[#allocation5 + $0xd0] sm:$0xf]
        %v331 = vld [vmem:[#allocation5 + $0xd4] sm:$0xf]
        %v332 = vld [vmem:[#allocation5 + $0xd8] sm:$0xf]
        %v333 = vld [vmem:[#allocation5 + $0xdc] sm:$0xf]
        %v334 = vld [vmem:[#allocation5 + $0xe0] sm:$0xf]
        %v335 = vld [vmem:[#allocation5 + $0xe4] sm:$0xf]
        %v336 = vld [vmem:[#allocation5 + $0xe8] sm:$0xf]
        %v337 = vld [vmem:[#allocation5 + $0xec] sm:$0xf]
        %v338 = vld [vmem:[#allocation5 + $0xf0] sm:$0xf]
        %v339 = vld [vmem:[#allocation5 + $0xf4] sm:$0xf]
        %v340 = vld [vmem:[#allocation5 + $0xf8] sm:$0xf]
        %v341 = vld [vmem:[#allocation5 + $0xfc] sm:$0xf]
        %v342 = vld [vmem:[#allocation5 + $0x100] sm:$0xf]
        %v343 = vld [vmem:[#allocation5 + $0x104] sm:$0xf]
        %v344 = vld [vmem:[#allocation5 + $0x108] sm:$0xf]
        %v345 = vld [vmem:[#allocation5 + $0x10c] sm:$0xf]
        %v346 = vld [vmem:[#allocation5 + $0x110] sm:$0xf]
        %v347 = vld [vmem:[#allocation5 + $0x114] sm:$0xf]
        %v348 = vld [vmem:[#allocation5 + $0x118] sm:$0xf]
        %v349 = vld [vmem:[#allocation5 + $0x11c] sm:$0xf]
        %v350 = vld [vmem:[#allocation5 + $0x120] sm:$0xf]
        %v351 = vld [vmem:[#allocation5 + $0x124] sm:$0xf]
        %v352 = vld [vmem:[#allocation5 + $0x128] sm:$0xf]
        %v353 = vld [vmem:[#allocation5 + $0x12c] sm:$0xf]
        %v354 = vld [vmem:[#allocation5 + $0x130] sm:$0xf]
        %v355 = vld [vmem:[#allocation5 + $0x134] sm:$0xf]
        %v356 = vld [vmem:[#allocation5 + $0x138] sm:$0xf]
        %v357 = vld [vmem:[#allocation5 + $0x13c] sm:$0xf]
        %v358 = vld [vmem:[#allocation5 + $0x140] sm:$0xf]
        %v359 = vld [vmem:[#allocation5 + $0x144] sm:$0xf]
        %v360 = vld [vmem:[#allocation5 + $0x148] sm:$0xf]
        %v361 = vld [vmem:[#allocation5 + $0x14c] sm:$0xf]
        %v362 = vld [vmem:[#allocation5 + $0x150] sm:$0xf]
        %v363 = vld [vmem:[#allocation5 + $0x154] sm:$0xf]
        %v364 = vld [vmem:[#allocation5 + $0x158] sm:$0xf]
        %v365 = vld [vmem:[#allocation5 + $0x15c] sm:$0xf]
        %v366 = vld [vmem:[#allocation5 + $0x160] sm:$0xf]
        %v367 = vld [vmem:[#allocation5 + $0x164] sm:$0xf]
        %v368 = vld [vmem:[#allocation5 + $0x168] sm:$0xf]
        %v369 = vld [vmem:[#allocation5 + $0x16c] sm:$0xf]
        %v370 = vld [vmem:[#allocation5 + $0x170] sm:$0xf]
        %v371 = vld [vmem:[#allocation5 + $0x174] sm:$0xf]
        %v372 = vld [vmem:[#allocation5 + $0x178] sm:$0xf]
        %v373 = vld [vmem:[#allocation5 + $0x17c] sm:$0xf]
        %v374 = vld [vmem:[#allocation5 + $0x180] sm:$0xf]
        %v375 = vld [vmem:[#allocation5 + $0x184] sm:$0xf]
        %v376 = vld [vmem:[#allocation5 + $0x188] sm:$0xf]
        %v377 = vld [vmem:[#allocation5 + $0x18c] sm:$0xf]
        %v378 = vld [vmem:[#allocation5 + $0x190] sm:$0xf]
        %v379 = vld [vmem:[#allocation5 + $0x194] sm:$0xf]
        %v380 = vld [vmem:[#allocation5 + $0x198] sm:$0xf]
        %v381 = vld [vmem:[#allocation5 + $0x19c] sm:$0xf]
        %v382 = vld [vmem:[#allocation5 + $0x1a0] sm:$0xf]
        %v383 = vld [vmem:[#allocation5 + $0x1a4] sm:$0xf]
        %v384 = vld [vmem:[#allocation5 + $0x1a8] sm:$0xf]
        %v385 = vld [vmem:[#allocation5 + $0x1ac] sm:$0xf]
        %v386 = vld [vmem:[#allocation5 + $0x1b0] sm:$0xf]
        %v387 = vld [vmem:[#allocation5 + $0x1b4] sm:$0xf]
        %v388 = vld [vmem:[#allocation5 + $0x1b8] sm:$0xf]
        %v389 = vld [vmem:[#allocation5 + $0x1bc] sm:$0xf]
        %v390 = vld [vmem:[#allocation5 + $0x1c0] sm:$0xf]
        %v391 = vld [vmem:[#allocation5 + $0x1c4] sm:$0xf]
        %v392 = vld [vmem:[#allocation5 + $0x1c8] sm:$0xf]
        %v393 = vld [vmem:[#allocation5 + $0x1cc] sm:$0xf]
        %v394 = vld [vmem:[#allocation5 + $0x1d0] sm:$0xf]
        %v395 = vld [vmem:[#allocation5 + $0x1d4] sm:$0xf]
        %v396 = vld [vmem:[#allocation5 + $0x1d8] sm:$0xf]
        %v397 = vld [vmem:[#allocation5 + $0x1dc] sm:$0xf]
        %v398 = vld [vmem:[#allocation5 + $0x1e0] sm:$0xf]
        %v399 = vld [vmem:[#allocation5 + $0x1e4] sm:$0xf]
        %v400 = vld [vmem:[#allocation5 + $0x1e8] sm:$0xf]
        %v401 = vld [vmem:[#allocation5 + $0x1ec] sm:$0xf]
        %v402 = vld [vmem:[#allocation5 + $0x1f0] sm:$0xf]
        %v403 = vld [vmem:[#allocation5 + $0x1f4] sm:$0xf]
        %v404 = vld [vmem:[#allocation5 + $0x1f8] sm:$0xf]
        %v405 = vld [vmem:[#allocation5 + $0x1fc] sm:$0xf]
        %v406 = vld [vmem:[#allocation5 + $0x200] sm:$0xf]
        %v407 = vld [vmem:[#allocation5 + $0x204] sm:$0xf]
        %v408 = vld [vmem:[#allocation5 + $0x208] sm:$0xf]
        %v409 = vld [vmem:[#allocation5 + $0x20c] sm:$0xf]
        %v410 = vld [vmem:[#allocation5 + $0x210] sm:$0xf]
        %v411 = vld [vmem:[#allocation5 + $0x214] sm:$0xf]
        %v412 = vld [vmem:[#allocation5 + $0x218] sm:$0xf]
        %v413 = vld [vmem:[#allocation5 + $0x21c] sm:$0xf]
        %v414 = vld [vmem:[#allocation5 + $0x220] sm:$0xf]
        %v415 = vld [vmem:[#allocation5 + $0x224] sm:$0xf]
        %v416 = vld [vmem:[#allocation5 + $0x228] sm:$0xf]
        %v417 = vld [vmem:[#allocation5 + $0x22c] sm:$0xf]
        %v418 = vld [vmem:[#allocation5 + $0x230] sm:$0xf]
        %v419 = vld [vmem:[#allocation5 + $0x234] sm:$0xf]
        %v420 = vld [vmem:[#allocation5 + $0x238] sm:$0xf]
        %v421 = vld [vmem:[#allocation5 + $0x23c] sm:$0xf]
        %v462 = vunpack.c.l.b16 %v238
        %v463 = vunpack.c.h.b16 %v238
        %v464 = vunpack.c.l.b16 %v239
        %v465 = vunpack.c.h.b16 %v239
        %v466 = vunpack.c.l.b16 %v240
        %v467 = vunpack.c.h.b16 %v240
        %v468 = vunpack.c.l.b16 %v241
        %v469 = vunpack.c.h.b16 %v241
        %v470 = vunpack.c.l.b16 %v242
        %v471 = vunpack.c.l.b16 %v243
        %v472 = vunpack.c.h.b16 %v243
        %v473 = vunpack.c.l.b16 %v244
        %v474 = vunpack.c.h.b16 %v244
        %v475 = vunpack.c.l.b16 %v245
        %v476 = vunpack.c.h.b16 %v245
        %v477 = vunpack.c.l.b16 %v246
        %v478 = vunpack.c.h.b16 %v246
        %v479 = vunpack.c.l.b16 %v247
        %v480 = vunpack.c.l.b16 %v248
        %v481 = vunpack.c.h.b16 %v248
        %v482 = vunpack.c.l.b16 %v249
        %v483 = vunpack.c.h.b16 %v249
        %v484 = vunpack.c.l.b16 %v250
        %v485 = vunpack.c.h.b16 %v250
        %v486 = vunpack.c.l.b16 %v251
        %v487 = vunpack.c.h.b16 %v251
        %v488 = vunpack.c.l.b16 %v252
        %v489 = vunpack.c.l.b16 %v253
        %v490 = vunpack.c.h.b16 %v253
        %v491 = vunpack.c.l.b16 %v254
        %v492 = vunpack.c.h.b16 %v254
        %v493 = vunpack.c.l.b16 %v255
        %v494 = vunpack.c.h.b16 %v255
        %v495 = vunpack.c.l.b16 %v256
        %v496 = vunpack.c.h.b16 %v256
        %v497 = vunpack.c.l.b16 %v257
        %v498 = vunpack.c.l.b16 %v258
        %v499 = vunpack.c.h.b16 %v258
        %v500 = vunpack.c.l.b16 %v259
        %v501 = vunpack.c.h.b16 %v259
        %v502 = vunpack.c.l.b16 %v260
        %v503 = vunpack.c.h.b16 %v260
        %v504 = vunpack.c.l.b16 %v261
        %v505 = vunpack.c.h.b16 %v261
        %v506 = vunpack.c.l.b16 %v262
        %v507 = vunpack.c.l.b16 %v263
        %v508 = vunpack.c.h.b16 %v263
        %v509 = vunpack.c.l.b16 %v264
        %v510 = vunpack.c.h.b16 %v264
        %v511 = vunpack.c.l.b16 %v265
        %v512 = vunpack.c.h.b16 %v265
        %v513 = vunpack.c.l.b16 %v266
        %v514 = vunpack.c.h.b16 %v266
        %v515 = vunpack.c.l.b16 %v267
        %v516 = vunpack.c.l.b16 %v268
        %v517 = vunpack.c.h.b16 %v268
        %v518 = vunpack.c.l.b16 %v269
        %v519 = vunpack.c.h.b16 %v269
        %v520 = vunpack.c.l.b16 %v270
        %v521 = vunpack.c.h.b16 %v270
        %v522 = vunpack.c.l.b16 %v271
        %v523 = vunpack.c.h.b16 %v271
        %v524 = vunpack.c.l.b16 %v272
        %v525 = vunpack.c.l.b16 %v273
        %v526 = vunpack.c.h.b16 %v273
        %v527 = vunpack.c.l.b16 %v274
        %v528 = vunpack.c.h.b16 %v274
        %v529 = vunpack.c.l.b16 %v275
        %v530 = vunpack.c.h.b16 %v275
        %v531 = vunpack.c.l.b16 %v276
        %v532 = vunpack.c.h.b16 %v276
        %v533 = vunpack.c.l.b16 %v277
        %v534 = vpack.c.b16 %v471, %v462
        %v535 = vpack.c.b16 %v472, %v463
        %v536 = vpack.c.b16 %v473, %v464
        %v537 = vpack.c.b16 %v474, %v465
        %v538 = vpack.c.b16 %v475, %v466
        %v539 = vpack.c.b16 %v476, %v467
        %v540 = vpack.c.b16 %v477, %v468
        %v541 = vpack.c.b16 %v478, %v469
        %v542 = vpack.c.b16 %v479, %v470
        %v543 = vpack.c.b16 %v489, %v480
        %v544 = vpack.c.b16 %v490, %v481
        %v545 = vpack.c.b16 %v491, %v482
        %v546 = vpack.c.b16 %v492, %v483
        %v547 = vpack.c.b16 %v493, %v484
        %v548 = vpack.c.b16 %v494, %v485
        %v549 = vpack.c.b16 %v495, %v486
        %v550 = vpack.c.b16 %v496, %v487
        %v551 = vpack.c.b16 %v497, %v488
        %v552 = vpack.c.b16 %v507, %v498
        %v553 = vpack.c.b16 %v508, %v499
        %v554 = vpack.c.b16 %v509, %v500
        %v555 = vpack.c.b16 %v510, %v501
        %v556 = vpack.c.b16 %v511, %v502
        %v557 = vpack.c.b16 %v512, %v503
        %v558 = vpack.c.b16 %v513, %v504
        %v559 = vpack.c.b16 %v514, %v505
        %v560 = vpack.c.b16 %v515, %v506
        %v561 = vpack.c.b16 %v525, %v516
        %v562 = vpack.c.b16 %v526, %v517
        %v563 = vpack.c.b16 %v527, %v518
        %v564 = vpack.c.b16 %v528, %v519
        %v565 = vpack.c.b16 %v529, %v520
        %v566 = vpack.c.b16 %v530, %v521
        %v567 = vpack.c.b16 %v531, %v522
        %v568 = vpack.c.b16 %v532, %v523
        %v569 = vpack.c.b16 %v533, %v524
        %v750 = vunpack.c.l.b16 %v278
        %v751 = vunpack.c.l.b16 %v279
        %v752 = vunpack.c.l.b16 %v280
        %v753 = vunpack.c.l.b16 %v281
        %v754 = vunpack.c.l.b16 %v282
        %v755 = vunpack.c.l.b16 %v283
        %v756 = vunpack.c.l.b16 %v284
        %v757 = vunpack.c.l.b16 %v285
        %v758 = vunpack.c.l.b16 %v286
        %v759 = vunpack.c.l.b16 %v287
        %v760 = vunpack.c.l.b16 %v288
        %v761 = vunpack.c.l.b16 %v289
        %v762 = vunpack.c.l.b16 %v290
        %v763 = vunpack.c.l.b16 %v291
        %v764 = vunpack.c.l.b16 %v292
        %v765 = vunpack.c.l.b16 %v293
        %v766 = vunpack.c.l.b16 %v294
        %v767 = vunpack.c.l.b16 %v295
        %v768 = vunpack.c.l.b16 %v296
        %v769 = vunpack.c.l.b16 %v297
        %v770 = vunpack.c.l.b16 %v298
        %v771 = vunpack.c.l.b16 %v299
        %v772 = vunpack.c.l.b16 %v300
        %v773 = vunpack.c.l.b16 %v301
        %v774 = vunpack.c.l.b16 %v302
        %v775 = vunpack.c.l.b16 %v303
        %v776 = vunpack.c.l.b16 %v304
        %v777 = vunpack.c.l.b16 %v305
        %v778 = vunpack.c.l.b16 %v306
        %v779 = vunpack.c.l.b16 %v307
        %v780 = vunpack.c.l.b16 %v308
        %v781 = vunpack.c.l.b16 %v309
        %v782 = vunpack.c.l.b16 %v310
        %v783 = vunpack.c.l.b16 %v311
        %v784 = vunpack.c.l.b16 %v312
        %v785 = vunpack.c.l.b16 %v313
        %v786 = vunpack.c.l.b16 %v314
        %v787 = vunpack.c.l.b16 %v315
        %v788 = vunpack.c.l.b16 %v316
        %v789 = vunpack.c.l.b16 %v317
        %v790 = vunpack.c.l.b16 %v318
        %v791 = vunpack.c.l.b16 %v319
        %v792 = vunpack.c.l.b16 %v320
        %v793 = vunpack.c.l.b16 %v321
        %v794 = vunpack.c.l.b16 %v322
        %v795 = vunpack.c.l.b16 %v323
        %v796 = vunpack.c.l.b16 %v324
        %v797 = vunpack.c.l.b16 %v325
        %v798 = vunpack.c.l.b16 %v326
        %v799 = vunpack.c.l.b16 %v327
        %v800 = vunpack.c.l.b16 %v328
        %v801 = vunpack.c.l.b16 %v329
        %v802 = vunpack.c.l.b16 %v330
        %v803 = vunpack.c.l.b16 %v331
        %v804 = vunpack.c.l.b16 %v332
        %v805 = vunpack.c.l.b16 %v333
        %v806 = vunpack.c.l.b16 %v334
        %v807 = vunpack.c.l.b16 %v335
        %v808 = vunpack.c.l.b16 %v336
        %v809 = vunpack.c.l.b16 %v337
        %v810 = vunpack.c.l.b16 %v338
        %v811 = vunpack.c.l.b16 %v339
        %v812 = vunpack.c.l.b16 %v340
        %v813 = vunpack.c.l.b16 %v341
        %v814 = vunpack.c.l.b16 %v342
        %v815 = vunpack.c.l.b16 %v343
        %v816 = vunpack.c.l.b16 %v344
        %v817 = vunpack.c.l.b16 %v345
        %v818 = vunpack.c.l.b16 %v346
        %v819 = vunpack.c.l.b16 %v347
        %v820 = vunpack.c.l.b16 %v348
        %v821 = vunpack.c.l.b16 %v349
        %v822 = vunpack.c.l.b16 %v350
        %v823 = vunpack.c.l.b16 %v351
        %v824 = vunpack.c.l.b16 %v352
        %v825 = vunpack.c.l.b16 %v353
        %v826 = vunpack.c.l.b16 %v354
        %v827 = vunpack.c.l.b16 %v355
        %v828 = vunpack.c.l.b16 %v356
        %v829 = vunpack.c.l.b16 %v357
        %v830 = vunpack.c.l.b16 %v358
        %v831 = vunpack.c.l.b16 %v359
        %v832 = vunpack.c.l.b16 %v360
        %v833 = vunpack.c.l.b16 %v361
        %v834 = vunpack.c.l.b16 %v362
        %v835 = vunpack.c.l.b16 %v363
        %v836 = vunpack.c.l.b16 %v364
        %v837 = vunpack.c.l.b16 %v365
        %v838 = vunpack.c.l.b16 %v366
        %v839 = vunpack.c.l.b16 %v367
        %v840 = vunpack.c.l.b16 %v368
        %v841 = vunpack.c.l.b16 %v369
        %v842 = vunpack.c.l.b16 %v370
        %v843 = vunpack.c.l.b16 %v371
        %v844 = vunpack.c.l.b16 %v372
        %v845 = vunpack.c.l.b16 %v373
        %v846 = vunpack.c.l.b16 %v374
        %v847 = vunpack.c.l.b16 %v375
        %v848 = vunpack.c.l.b16 %v376
        %v849 = vunpack.c.l.b16 %v377
        %v850 = vunpack.c.l.b16 %v378
        %v851 = vunpack.c.l.b16 %v379
        %v852 = vunpack.c.l.b16 %v380
        %v853 = vunpack.c.l.b16 %v381
        %v854 = vunpack.c.l.b16 %v382
        %v855 = vunpack.c.l.b16 %v383
        %v856 = vunpack.c.l.b16 %v384
        %v857 = vunpack.c.l.b16 %v385
        %v858 = vunpack.c.l.b16 %v386
        %v859 = vunpack.c.l.b16 %v387
        %v860 = vunpack.c.l.b16 %v388
        %v861 = vunpack.c.l.b16 %v389
        %v862 = vunpack.c.l.b16 %v390
        %v863 = vunpack.c.l.b16 %v391
        %v864 = vunpack.c.l.b16 %v392
        %v865 = vunpack.c.l.b16 %v393
        %v866 = vunpack.c.l.b16 %v394
        %v867 = vunpack.c.l.b16 %v395
        %v868 = vunpack.c.l.b16 %v396
        %v869 = vunpack.c.l.b16 %v397
        %v870 = vunpack.c.l.b16 %v398
        %v871 = vunpack.c.l.b16 %v399
        %v872 = vunpack.c.l.b16 %v400
        %v873 = vunpack.c.l.b16 %v401
        %v874 = vunpack.c.l.b16 %v402
        %v875 = vunpack.c.l.b16 %v403
        %v876 = vunpack.c.l.b16 %v404
        %v877 = vunpack.c.l.b16 %v405
        %v878 = vunpack.c.l.b16 %v406
        %v879 = vunpack.c.l.b16 %v407
        %v880 = vunpack.c.l.b16 %v408
        %v881 = vunpack.c.l.b16 %v409
        %v882 = vunpack.c.l.b16 %v410
        %v883 = vunpack.c.l.b16 %v411
        %v884 = vunpack.c.l.b16 %v412
        %v885 = vunpack.c.l.b16 %v413
        %v886 = vunpack.c.l.b16 %v414
        %v887 = vunpack.c.l.b16 %v415
        %v888 = vunpack.c.l.b16 %v416
        %v889 = vunpack.c.l.b16 %v417
        %v890 = vunpack.c.l.b16 %v418
        %v891 = vunpack.c.l.b16 %v419
        %v892 = vunpack.c.l.b16 %v420
        %v893 = vunpack.c.l.b16 %v421
        %v894 = vpack.c.b16 %v751, %v750
        %v895 = vpack.c.b16 %v753, %v752
        %v896 = vpack.c.b16 %v755, %v754
        %v897 = vpack.c.b16 %v757, %v756
        %v898 = vpack.c.b16 %v759, %v758
        %v899 = vpack.c.b16 %v761, %v760
        %v900 = vpack.c.b16 %v763, %v762
        %v901 = vpack.c.b16 %v765, %v764
        %v902 = vpack.c.b16 %v767, %v766
        %v903 = vpack.c.b16 %v769, %v768
        %v904 = vpack.c.b16 %v771, %v770
        %v905 = vpack.c.b16 %v773, %v772
        %v906 = vpack.c.b16 %v775, %v774
        %v907 = vpack.c.b16 %v777, %v776
        %v908 = vpack.c.b16 %v779, %v778
        %v909 = vpack.c.b16 %v781, %v780
        %v910 = vpack.c.b16 %v783, %v782
        %v911 = vpack.c.b16 %v785, %v784
        %v912 = vpack.c.b16 %v787, %v786
        %v913 = vpack.c.b16 %v789, %v788
        %v914 = vpack.c.b16 %v791, %v790
        %v915 = vpack.c.b16 %v793, %v792
        %v916 = vpack.c.b16 %v795, %v794
        %v917 = vpack.c.b16 %v797, %v796
        %v918 = vpack.c.b16 %v799, %v798
        %v919 = vpack.c.b16 %v801, %v800
        %v920 = vpack.c.b16 %v803, %v802
        %v921 = vpack.c.b16 %v805, %v804
        %v922 = vpack.c.b16 %v807, %v806
        %v923 = vpack.c.b16 %v809, %v808
        %v924 = vpack.c.b16 %v811, %v810
        %v925 = vpack.c.b16 %v813, %v812
        %v926 = vpack.c.b16 %v815, %v814
        %v927 = vpack.c.b16 %v817, %v816
        %v928 = vpack.c.b16 %v819, %v818
        %v929 = vpack.c.b16 %v821, %v820
        %v930 = vpack.c.b16 %v823, %v822
        %v931 = vpack.c.b16 %v825, %v824
        %v932 = vpack.c.b16 %v827, %v826
        %v933 = vpack.c.b16 %v829, %v828
        %v934 = vpack.c.b16 %v831, %v830
        %v935 = vpack.c.b16 %v833, %v832
        %v936 = vpack.c.b16 %v835, %v834
        %v937 = vpack.c.b16 %v837, %v836
        %v938 = vpack.c.b16 %v839, %v838
        %v939 = vpack.c.b16 %v841, %v840
        %v940 = vpack.c.b16 %v843, %v842
        %v941 = vpack.c.b16 %v845, %v844
        %v942 = vpack.c.b16 %v847, %v846
        %v943 = vpack.c.b16 %v849, %v848
        %v944 = vpack.c.b16 %v851, %v850
        %v945 = vpack.c.b16 %v853, %v852
        %v946 = vpack.c.b16 %v855, %v854
        %v947 = vpack.c.b16 %v857, %v856
        %v948 = vpack.c.b16 %v859, %v858
        %v949 = vpack.c.b16 %v861, %v860
        %v950 = vpack.c.b16 %v863, %v862
        %v951 = vpack.c.b16 %v865, %v864
        %v952 = vpack.c.b16 %v867, %v866
        %v953 = vpack.c.b16 %v869, %v868
        %v954 = vpack.c.b16 %v871, %v870
        %v955 = vpack.c.b16 %v873, %v872
        %v956 = vpack.c.b16 %v875, %v874
        %v957 = vpack.c.b16 %v877, %v876
        %v958 = vpack.c.b16 %v879, %v878
        %v959 = vpack.c.b16 %v881, %v880
        %v960 = vpack.c.b16 %v883, %v882
        %v961 = vpack.c.b16 %v885, %v884
        %v962 = vpack.c.b16 %v887, %v886
        %v963 = vpack.c.b16 %v889, %v888
        %v964 = vpack.c.b16 %v891, %v890
        %v965 = vpack.c.b16 %v893, %v892
        %1038 = vmatpush.bf16.msra.mxu0 %v901
        %1039 = vmatpush.bf16.msra.mxu0 %v900
        %1040 = vmatpush.bf16.msra.mxu0 %v899
        %1041 = vmatpush.bf16.msra.mxu0 %v898
        %1042 = vmatpush.bf16.msra.mxu0 %v897
        %1043 = vmatpush.bf16.msra.mxu0 %v896
        %1044 = vmatpush.bf16.msra.mxu0 %v895
        %1045 = vmatpush.bf16.msra.mxu0 %v894
        %1046 = vmatmul.bf16.gmra.mxu0 %v534
        %v1047 = vpop.f32.mrf.mxu0
        %v1048 = vadd.f32 0.0, %v1047
        %v1049 = vpop.f32.mrf.mxu0
        %v1050 = vadd.f32 0.0, %v1049
        %1051 = vmatmul.bf16.gmra.mxu0 %v543
        %v1052 = vpop.f32.mrf.mxu0
        %v1053 = vadd.f32 0.0, %v1052
        %v1054 = vpop.f32.mrf.mxu0
        %v1055 = vadd.f32 0.0, %v1054
        %1056 = vmatmul.bf16.gmra.mxu0 %v552
        %v1057 = vpop.f32.mrf.mxu0
        %v1058 = vadd.f32 0.0, %v1057
        %v1059 = vpop.f32.mrf.mxu0
        %v1060 = vadd.f32 0.0, %v1059
        %1061 = vmatmul.bf16.gmra.mxu0 %v561
        %v1062 = vpop.f32.mrf.mxu0
        %v1063 = vadd.f32 0.0, %v1062
        %v1064 = vpop.f32.mrf.mxu0
        %v1065 = vadd.f32 0.0, %v1064
        %1066 = vdwg.mxu0
        %1067 = vmatpush.bf16.msra.mxu0 %v909
        %1068 = vmatpush.bf16.msra.mxu0 %v908
        %1069 = vmatpush.bf16.msra.mxu0 %v907
        %1070 = vmatpush.bf16.msra.mxu0 %v906
        %1071 = vmatpush.bf16.msra.mxu0 %v905
        %1072 = vmatpush.bf16.msra.mxu0 %v904
        %1073 = vmatpush.bf16.msra.mxu0 %v903
        %1074 = vmatpush.bf16.msra.mxu0 %v902
        %1075 = vmatmul.bf16.gmra.mxu0 %v535
        %v1076 = vpop.f32.mrf.mxu0
        %v1077 = vadd.f32 %v1048, %v1076
        %v1078 = vpop.f32.mrf.mxu0
        %v1079 = vadd.f32 %v1050, %v1078
        %1080 = vmatmul.bf16.gmra.mxu0 %v544
        %v1081 = vpop.f32.mrf.mxu0
        %v1082 = vadd.f32 %v1053, %v1081
        %v1083 = vpop.f32.mrf.mxu0
        %v1084 = vadd.f32 %v1055, %v1083
        %1085 = vmatmul.bf16.gmra.mxu0 %v553
        %v1086 = vpop.f32.mrf.mxu0
        %v1087 = vadd.f32 %v1058, %v1086
        %v1088 = vpop.f32.mrf.mxu0
        %v1089 = vadd.f32 %v1060, %v1088
        %1090 = vmatmul.bf16.gmra.mxu0 %v562
        %v1091 = vpop.f32.mrf.mxu0
        %v1092 = vadd.f32 %v1063, %v1091
        %v1093 = vpop.f32.mrf.mxu0
        %v1094 = vadd.f32 %v1065, %v1093
        %1095 = vdwg.mxu0
        %1096 = vmatpush.bf16.msra.mxu0 %v917
        %1097 = vmatpush.bf16.msra.mxu0 %v916
        %1098 = vmatpush.bf16.msra.mxu0 %v915
        %1099 = vmatpush.bf16.msra.mxu0 %v914
        %1100 = vmatpush.bf16.msra.mxu0 %v913
        %1101 = vmatpush.bf16.msra.mxu0 %v912
        %1102 = vmatpush.bf16.msra.mxu0 %v911
        %1103 = vmatpush.bf16.msra.mxu0 %v910
        %1104 = vmatmul.bf16.gmra.mxu0 %v536
        %v1105 = vpop.f32.mrf.mxu0
        %v1106 = vadd.f32 %v1077, %v1105
        %v1107 = vpop.f32.mrf.mxu0
        %v1108 = vadd.f32 %v1079, %v1107
        %1109 = vmatmul.bf16.gmra.mxu0 %v545
        %v1110 = vpop.f32.mrf.mxu0
        %v1111 = vadd.f32 %v1082, %v1110
        %v1112 = vpop.f32.mrf.mxu0
        %v1113 = vadd.f32 %v1084, %v1112
        %1114 = vmatmul.bf16.gmra.mxu0 %v554
        %v1115 = vpop.f32.mrf.mxu0
        %v1116 = vadd.f32 %v1087, %v1115
        %v1117 = vpop.f32.mrf.mxu0
        %v1118 = vadd.f32 %v1089, %v1117
        %1119 = vmatmul.bf16.gmra.mxu0 %v563
        %v1120 = vpop.f32.mrf.mxu0
        %v1121 = vadd.f32 %v1092, %v1120
        %v1122 = vpop.f32.mrf.mxu0
        %v1123 = vadd.f32 %v1094, %v1122
        %1124 = vdwg.mxu0
        %1125 = vmatpush.bf16.msra.mxu0 %v925
        %1126 = vmatpush.bf16.msra.mxu0 %v924
        %1127 = vmatpush.bf16.msra.mxu0 %v923
        %1128 = vmatpush.bf16.msra.mxu0 %v922
        %1129 = vmatpush.bf16.msra.mxu0 %v921
        %1130 = vmatpush.bf16.msra.mxu0 %v920
        %1131 = vmatpush.bf16.msra.mxu0 %v919
        %1132 = vmatpush.bf16.msra.mxu0 %v918
        %1133 = vmatmul.bf16.gmra.mxu0 %v537
        %v1134 = vpop.f32.mrf.mxu0
        %v1135 = vadd.f32 %v1106, %v1134
        %v1136 = vpop.f32.mrf.mxu0
        %v1137 = vadd.f32 %v1108, %v1136
        %1138 = vmatmul.bf16.gmra.mxu0 %v546
        %v1139 = vpop.f32.mrf.mxu0
        %v1140 = vadd.f32 %v1111, %v1139
        %v1141 = vpop.f32.mrf.mxu0
        %v1142 = vadd.f32 %v1113, %v1141
        %1143 = vmatmul.bf16.gmra.mxu0 %v555
        %v1144 = vpop.f32.mrf.mxu0
        %v1145 = vadd.f32 %v1116, %v1144
        %v1146 = vpop.f32.mrf.mxu0
        %v1147 = vadd.f32 %v1118, %v1146
        %1148 = vmatmul.bf16.gmra.mxu0 %v564
        %v1149 = vpop.f32.mrf.mxu0
        %v1150 = vadd.f32 %v1121, %v1149
        %v1151 = vpop.f32.mrf.mxu0
        %v1152 = vadd.f32 %v1123, %v1151
        %1153 = vdwg.mxu0
        %1154 = vmatpush.bf16.msra.mxu0 %v933
        %1155 = vmatpush.bf16.msra.mxu0 %v932
        %1156 = vmatpush.bf16.msra.mxu0 %v931
        %1157 = vmatpush.bf16.msra.mxu0 %v930
        %1158 = vmatpush.bf16.msra.mxu0 %v929
        %1159 = vmatpush.bf16.msra.mxu0 %v928
        %1160 = vmatpush.bf16.msra.mxu0 %v927
        %1161 = vmatpush.bf16.msra.mxu0 %v926
        %1162 = vmatmul.bf16.gmra.mxu0 %v538
        %v1163 = vpop.f32.mrf.mxu0
        %v1164 = vadd.f32 %v1135, %v1163
        %v1165 = vpop.f32.mrf.mxu0
        %v1166 = vadd.f32 %v1137, %v1165
        %1167 = vmatmul.bf16.gmra.mxu0 %v547
        %v1168 = vpop.f32.mrf.mxu0
        %v1169 = vadd.f32 %v1140, %v1168
        %v1170 = vpop.f32.mrf.mxu0
        %v1171 = vadd.f32 %v1142, %v1170
        %1172 = vmatmul.bf16.gmra.mxu0 %v556
        %v1173 = vpop.f32.mrf.mxu0
        %v1174 = vadd.f32 %v1145, %v1173
        %v1175 = vpop.f32.mrf.mxu0
        %v1176 = vadd.f32 %v1147, %v1175
        %1177 = vmatmul.bf16.gmra.mxu0 %v565
        %v1178 = vpop.f32.mrf.mxu0
        %v1179 = vadd.f32 %v1150, %v1178
        %v1180 = vpop.f32.mrf.mxu0
        %v1181 = vadd.f32 %v1152, %v1180
        %1182 = vdwg.mxu0
        %1183 = vmatpush.bf16.msra.mxu0 %v941
        %1184 = vmatpush.bf16.msra.mxu0 %v940
        %1185 = vmatpush.bf16.msra.mxu0 %v939
        %1186 = vmatpush.bf16.msra.mxu0 %v938
        %1187 = vmatpush.bf16.msra.mxu0 %v937
        %1188 = vmatpush.bf16.msra.mxu0 %v936
        %1189 = vmatpush.bf16.msra.mxu0 %v935
        %1190 = vmatpush.bf16.msra.mxu0 %v934
        %1191 = vmatmul.bf16.gmra.mxu0 %v539
        %v1192 = vpop.f32.mrf.mxu0
        %v1193 = vadd.f32 %v1164, %v1192
        %v1194 = vpop.f32.mrf.mxu0
        %v1195 = vadd.f32 %v1166, %v1194
        %1196 = vmatmul.bf16.gmra.mxu0 %v548
        %v1197 = vpop.f32.mrf.mxu0
        %v1198 = vadd.f32 %v1169, %v1197
        %v1199 = vpop.f32.mrf.mxu0
        %v1200 = vadd.f32 %v1171, %v1199
        %1201 = vmatmul.bf16.gmra.mxu0 %v557
        %v1202 = vpop.f32.mrf.mxu0
        %v1203 = vadd.f32 %v1174, %v1202
        %v1204 = vpop.f32.mrf.mxu0
        %v1205 = vadd.f32 %v1176, %v1204
        %1206 = vmatmul.bf16.gmra.mxu0 %v566
        %v1207 = vpop.f32.mrf.mxu0
        %v1208 = vadd.f32 %v1179, %v1207
        %v1209 = vpop.f32.mrf.mxu0
        %v1210 = vadd.f32 %v1181, %v1209
        %1211 = vdwg.mxu0
        %1212 = vmatpush.bf16.msra.mxu0 %v949
        %1213 = vmatpush.bf16.msra.mxu0 %v948
        %1214 = vmatpush.bf16.msra.mxu0 %v947
        %1215 = vmatpush.bf16.msra.mxu0 %v946
        %1216 = vmatpush.bf16.msra.mxu0 %v945
        %1217 = vmatpush.bf16.msra.mxu0 %v944
        %1218 = vmatpush.bf16.msra.mxu0 %v943
        %1219 = vmatpush.bf16.msra.mxu0 %v942
        %1220 = vmatmul.bf16.gmra.mxu0 %v540
        %v1221 = vpop.f32.mrf.mxu0
        %v1222 = vadd.f32 %v1193, %v1221
        %v1223 = vpop.f32.mrf.mxu0
        %v1224 = vadd.f32 %v1195, %v1223
        %1225 = vmatmul.bf16.gmra.mxu0 %v549
        %v1226 = vpop.f32.mrf.mxu0
        %v1227 = vadd.f32 %v1198, %v1226
        %v1228 = vpop.f32.mrf.mxu0
        %v1229 = vadd.f32 %v1200, %v1228
        %1230 = vmatmul.bf16.gmra.mxu0 %v558
        %v1231 = vpop.f32.mrf.mxu0
        %v1232 = vadd.f32 %v1203, %v1231
        %v1233 = vpop.f32.mrf.mxu0
        %v1234 = vadd.f32 %v1205, %v1233
        %1235 = vmatmul.bf16.gmra.mxu0 %v567
        %v1236 = vpop.f32.mrf.mxu0
        %v1237 = vadd.f32 %v1208, %v1236
        %v1238 = vpop.f32.mrf.mxu0
        %v1239 = vadd.f32 %v1210, %v1238
        %1240 = vdwg.mxu0
        %1241 = vmatpush.bf16.msra.mxu0 %v957
        %1242 = vmatpush.bf16.msra.mxu0 %v956
        %1243 = vmatpush.bf16.msra.mxu0 %v955
        %1244 = vmatpush.bf16.msra.mxu0 %v954
        %1245 = vmatpush.bf16.msra.mxu0 %v953
        %1246 = vmatpush.bf16.msra.mxu0 %v952
        %1247 = vmatpush.bf16.msra.mxu0 %v951
        %1248 = vmatpush.bf16.msra.mxu0 %v950
        %1249 = vmatmul.bf16.gmra.mxu0 %v541
        %v1250 = vpop.f32.mrf.mxu0
        %v1251 = vadd.f32 %v1222, %v1250
        %v1252 = vpop.f32.mrf.mxu0
        %v1253 = vadd.f32 %v1224, %v1252
        %1254 = vmatmul.bf16.gmra.mxu0 %v550
        %v1255 = vpop.f32.mrf.mxu0
        %v1256 = vadd.f32 %v1227, %v1255
        %v1257 = vpop.f32.mrf.mxu0
        %v1258 = vadd.f32 %v1229, %v1257
        %1259 = vmatmul.bf16.gmra.mxu0 %v559
        %v1260 = vpop.f32.mrf.mxu0
        %v1261 = vadd.f32 %v1232, %v1260
        %v1262 = vpop.f32.mrf.mxu0
        %v1263 = vadd.f32 %v1234, %v1262
        %1264 = vmatmul.bf16.gmra.mxu0 %v568
        %v1265 = vpop.f32.mrf.mxu0
        %v1266 = vadd.f32 %v1237, %v1265
        %v1267 = vpop.f32.mrf.mxu0
        %v1268 = vadd.f32 %v1239, %v1267
        %1269 = vdwg.mxu0
        %1270 = vmatpush.bf16.msra.mxu0 %v965
        %1271 = vmatpush.bf16.msra.mxu0 %v964
        %1272 = vmatpush.bf16.msra.mxu0 %v963
        %1273 = vmatpush.bf16.msra.mxu0 %v962
        %1274 = vmatpush.bf16.msra.mxu0 %v961
        %1275 = vmatpush.bf16.msra.mxu0 %v960
        %1276 = vmatpush.bf16.msra.mxu0 %v959
        %1277 = vmatpush.bf16.msra.mxu0 %v958
        %1278 = vmatmul.bf16.gmra.mxu0 %v542
        %v1279 = vpop.f32.mrf.mxu0
        %v1280 = vadd.f32 %v1251, %v1279
        %v1281 = vpop.f32.mrf.mxu0
        %v1282 = vadd.f32 %v1253, %v1281
        %1283 = vmatmul.bf16.gmra.mxu0 %v551
        %v1284 = vpop.f32.mrf.mxu0
        %v1285 = vadd.f32 %v1256, %v1284
        %v1286 = vpop.f32.mrf.mxu0
        %v1287 = vadd.f32 %v1258, %v1286
        %1288 = vmatmul.bf16.gmra.mxu0 %v560
        %v1289 = vpop.f32.mrf.mxu0
        %v1290 = vadd.f32 %v1261, %v1289
        %v1291 = vpop.f32.mrf.mxu0
        %v1292 = vadd.f32 %v1263, %v1291
        %1293 = vmatmul.bf16.gmra.mxu0 %v569
        %v1294 = vpop.f32.mrf.mxu0
        %v1295 = vadd.f32 %v1266, %v1294
        %v1296 = vpop.f32.mrf.mxu0
        %v1297 = vadd.f32 %v1268, %v1296
        %1298 = vdwg.mxu0
        %v1299 = vld [vmem:[%s2] sm:$0x1]
        %v1301 = vperm.slane %v1299, 0
        %v1303 = vmul.f32 %v1280, %v1301
        %v1304 = vmul.f32 %v1282, %v1301
        %v1305 = vmul.f32 %v1285, %v1301
        %v1306 = vmul.f32 %v1287, %v1301
        %v1307 = vmul.f32 %v1290, %v1301
        %v1308 = vmul.f32 %v1292, %v1301
        %v1309 = vmul.f32 %v1295, %v1301
        %v1310 = vmul.f32 %v1297, %v1301
        %v1311 = vld [vmem:[%s3] sm:$0x1]
        %v1313 = vperm.slane %v1311, 0
        %v1315 = vadd.f32 %v1303, %v1313
        %v1316 = vadd.f32 %v1304, %v1313
        %v1317 = vadd.f32 %v1305, %v1313
        %v1318 = vadd.f32 %v1306, %v1313
        %v1319 = vadd.f32 %v1307, %v1313
        %v1320 = vadd.f32 %v1308, %v1313
        %v1321 = vadd.f32 %v1309, %v1313
        %v1322 = vadd.f32 %v1310, %v1313
        %v1323 = vmul.f32 %v1315, 1.442695
        %v1324 = vpow.pop %v1323
        %v1325 = vmul.f32 %v1316, 1.442695
        %v1326 = vpow.pop %v1325
        %v1327 = vmul.f32 %v1317, 1.442695
        %v1328 = vpow.pop %v1327
        %v1329 = vmul.f32 %v1318, 1.442695
        %v1330 = vpow.pop %v1329
        %v1331 = vmul.f32 %v1319, 1.442695
        %v1332 = vpow.pop %v1331
        %v1333 = vmul.f32 %v1320, 1.442695
        %v1334 = vpow.pop %v1333
        %v1335 = vmul.f32 %v1321, 1.442695
        %v1336 = vpow.pop %v1335
        %v1337 = vmul.f32 %v1322, 1.442695
        %v1338 = vpow.pop %v1337
        %v1339 = vadd.f32 %v1324, 1.0
        %v1340 = vadd.f32 %v1326, 1.0
        %v1341 = vadd.f32 %v1328, 1.0
        %v1342 = vadd.f32 %v1330, 1.0
        %v1343 = vadd.f32 %v1332, 1.0
        %v1344 = vadd.f32 %v1334, 1.0
        %v1345 = vadd.f32 %v1336, 1.0
        %v1346 = vadd.f32 %v1338, 1.0
        %v1347 = vmul.f32 %v1339, %v1339
        %v1348 = vmul.f32 %v1340, %v1340
        %v1349 = vmul.f32 %v1341, %v1341
        %v1350 = vmul.f32 %v1342, %v1342
        %v1351 = vmul.f32 %v1343, %v1343
        %v1352 = vmul.f32 %v1344, %v1344
        %v1353 = vmul.f32 %v1345, %v1345
        %v1354 = vmul.f32 %v1346, %v1346
        %v1355 = vadd.f32 %v1347, 1.0
        %v1356 = vadd.f32 %v1348, 1.0
        %v1357 = vadd.f32 %v1349, 1.0
        %v1358 = vadd.f32 %v1350, 1.0
        %v1359 = vadd.f32 %v1351, 1.0
        %v1360 = vadd.f32 %v1352, 1.0
        %v1361 = vadd.f32 %v1353, 1.0
        %v1362 = vadd.f32 %v1354, 1.0
        %v1363 = vrcp.pop %v1355
        %v1364 = vrcp.pop %v1356
        %v1365 = vrcp.pop %v1357
        %v1366 = vrcp.pop %v1358
        %v1367 = vrcp.pop %v1359
        %v1368 = vrcp.pop %v1360
        %v1369 = vrcp.pop %v1361
        %v1370 = vrcp.pop %v1362
        %v1371 = vmul.f32 %v1363, 2.0
        %v1372 = vmul.f32 %v1364, 2.0
        %v1373 = vmul.f32 %v1365, 2.0
        %v1374 = vmul.f32 %v1366, 2.0
        %v1375 = vmul.f32 %v1367, 2.0
        %v1376 = vmul.f32 %v1368, 2.0
        %v1377 = vmul.f32 %v1369, 2.0
        %v1378 = vmul.f32 %v1370, 2.0
        %v1379 = vsub.f32 1.0, %v1371
        %v1380 = vsub.f32 1.0, %v1372
        %v1381 = vsub.f32 1.0, %v1373
        %v1382 = vsub.f32 1.0, %v1374
        %v1383 = vsub.f32 1.0, %v1375
        %v1384 = vsub.f32 1.0, %v1376
        %v1385 = vsub.f32 1.0, %v1377
        %v1386 = vsub.f32 1.0, %v1378
        %v1387 = vmul.f32 %v1315, %v1379
        %v1388 = vmul.f32 %v1316, %v1380
        %v1389 = vmul.f32 %v1317, %v1381
        %v1390 = vmul.f32 %v1318, %v1382
        %v1391 = vmul.f32 %v1319, %v1383
        %v1392 = vmul.f32 %v1320, %v1384
        %v1393 = vmul.f32 %v1321, %v1385
        %v1394 = vmul.f32 %v1322, %v1386
        %v1395 = vpack.c.bf16 %v1387, %v1387
        %v1396 = vpack.c.bf16 %v1388, %v1388
        %v1397 = vpack.c.bf16 %v1389, %v1389
        %v1398 = vpack.c.bf16 %v1390, %v1390
        %v1399 = vpack.c.bf16 %v1391, %v1391
        %v1400 = vpack.c.bf16 %v1392, %v1392
        %v1401 = vpack.c.bf16 %v1393, %v1393
        %v1402 = vpack.c.bf16 %v1394, %v1394
        %1403 = vst [vmem:[%s235] sm:$0xf] %v1395
        %1404 = vst [vmem:[%s235 + $0x4] sm:$0xf] %v1396
        %1405 = vst [vmem:[%s235 + $0x8] sm:$0xf] %v1397
        %1406 = vst [vmem:[%s235 + $0xc] sm:$0xf] %v1398
        %1407 = vst [vmem:[%s235 + $0x10] sm:$0xf] %v1399
        %1408 = vst [vmem:[%s235 + $0x14] sm:$0xf] %v1400
        %1409 = vst [vmem:[%s235 + $0x18] sm:$0xf] %v1401
        %1410 = vst [vmem:[%s235 + $0x1c] sm:$0xf] %v1402
        %s1411 = sand.u32 %s119, 1
        %s1412 = scalar_lea.sflag [#allocation4], %s1411
        %s1413 = sand.u32 %s119, 1
        %s1414 = smul.addr %s1413, 32
        %s1415 = scalar_lea.vmem [#allocation7], %s1414
        // Predicated region
        $region45: #{tpu_custom_call.1} parent=35 // pred_check
          %p1416 = pneg %p129
        $region46: #{tpu_custom_call.1} parent=35 // pred_check_branch
          %1418 = sbr.rel (%p1416) target = $region48
        $region47: #{tpu_custom_call.1} parent=35 // pred_region
          %s1419 = smul.u32 8, %s22
          %1421 = vsyncadd %s1412, 0
          %s1422 = smul.addr %s1419, 4
          %s1423 = scalar_lea.hbm %s4, %s1422
          %s1424 = sshll.u32 %s1415, 4
          %s1425 = int_to_ptr.vmem [resolvable:$true] %s1424
          %s1426 = sshll.u32 %s1423, 4
          %s1427 = int_to_ptr.hbm [resolvable:$true] %s1426
          %1432 = dma.vmem_to_hbm [thread:$0]  %s1425, 512, %s1427, %s1412, 64, 64, 4
        $region48: #{tpu_custom_call.1} parent=35 // pred_fallthru
          _
      $region36: #{tpu_custom_call.1} parent=5 // pred_fallthru
        _
      %p1433 = scmp.le.s32.totalorder 2, %s17
      // Predicated region
      $region49: #{tpu_custom_call.1} parent=5 // pred_check
        %p1434 = pneg %p1433
      $region50: #{tpu_custom_call.1} parent=5 // pred_check_branch
        %1436 = sbr.rel (%p1434) target = $region52
      $region51: #{tpu_custom_call.1} parent=5 // pred_region
        %s1437 = ssub.s32 %s17, 2
        // Predicated region
        $region53: #{tpu_custom_call.1} parent=51 // pred_check
          %p1438 = pneg %p135
        $region54: #{tpu_custom_call.1} parent=51 // pred_check_branch
          %1440 = sbr.rel (%p1438) target = $region56
        $region55: #{tpu_custom_call.1} parent=51 // pred_region
          %s1441 = sand.u32 %s120, 1
          %s1442 = scalar_lea.sflag [#allocation4], %s1441
          %s1443 = sand.u32 %s120, 1
          %s1444 = smul.addr %s1443, 32
          %s1445 = scalar_lea.vmem [#allocation7], %s1444
          %1447 = dma.done %s1442, 512
        $region56: #{tpu_custom_call.1} parent=51 // pred_fallthru
          _
      $region52: #{tpu_custom_call.1} parent=5 // pred_fallthru
        _
    $region6: #{tpu_custom_call.1} parent=1 // loop_footer
      %s21 = sadd.s32 1, %s17
    $region7: #{tpu_custom_call.1} parent=1 // loop_footer_branch
      %16 = sbr.rel target = $region3
    $region8: #{tpu_custom_call.1} parent=1 // loop_exit
      _
    %1448 = vsyncpa [#allocation3], 1
    %s1449 = scalar_lea.sflag [#allocation3], 1
    %1450 = vsyncpa %s1449, 1
    %1451 = vsyncpa [#allocation6], 1
    %1452 = vsyncpa [#allocation4], 1
    %s1453 = scalar_lea.sflag [#allocation4], 1
    %1454 = vsyncpa %s1453, 1

</llo_original>
